<compile_context>
chip_gen: v7x
topology: tpu7x:2x2x1
jax: 0.10.0
libtpu: 0.0.40
codegen_flags: <defaults>
</compile_context>

<pallas_src>
import functools
import math

import jax
import jax.numpy as jnp
from jax.experimental import pallas as pl
from jax.experimental.pallas import tpu as pltpu


def _round_up(x, m):
    return ((x + m - 1) // m) * m


def _abs_pow(x, p):
    """|x|**p with cheap VPU paths for common exponents (p is a Python float)."""
    if p == 1.0:
        return jnp.abs(x)
    if p == 2.0:
        return x * x
    if float(p).is_integer() and 2.0 < p <= 16.0:
        ip = int(p)
        base = x if ip % 2 == 0 else jnp.abs(x)   # even power: sign irrelevant
        # Square-and-multiply: short VPU dependency chain (p=8 -> 3 squarings).
        acc = base
        result = None
        e = ip
        while True:
            if e & 1:
                result = acc if result is None else result * acc
            e >>= 1
            if e == 0:
                break
            acc = acc * acc
        return result
    # General non-integer p: transcendental fallback (exp(p*log|x|)).
    return jnp.abs(x) ** p


def _lp_distance_kernel(pred_ref, true_ref, out_ref, *, p, inv_z):
    # Upcast in-register; inputs are streamed from HBM in their native dtype.
    x = pred_ref[...].astype(jnp.float32)
    t = true_ref[...].astype(jnp.float32)
    n = x.shape[-1]
    ones_col = jnp.ones((n, 1), dtype=jnp.float32)   # MXU row-sum operand

    # Numerically-stable softmax along the class (lane) axis.
    m = jnp.max(x, axis=-1, keepdims=True)                          # XLU
    e = jnp.exp(x - m)                                              # EUP
    # Softmax denominator on the MXU (completely free slot in this kernel).
    s = jnp.dot(e, ones_col, preferred_element_type=jnp.float32)    # (TR, 1)
    inv = pl.reciprocal(s, approx=True)                             # EUP vrcp
    inv = inv * (2.0 - s * inv)            # one Newton step: per-row cost, ~f32 acc
    sm = e * inv

    d = _abs_pow(sm - t, p)
    # Final Lp sum over classes: MXU again (keeps XLU/VPU slots free).
    r = jnp.dot(d, ones_col, preferred_element_type=jnp.float32)    # (TR, 1)
    r = r * inv_z
    out_ref[...] = r[:, 0][None, :]                                 # lane-dense (1, TR)


def _vmem_limit_bytes():
    """~55% of physical VMEM per generation (128 MiB v5e/v6e, 64 MiB v7x)."""
    try:
        phys = int(pltpu.get_tpu_info().vmem_capacity_bytes)
    except Exception:
        phys = 64 * 1024 * 1024            # conservative fallback (v7x-sized)
    return max(32 * 1024 * 1024, min(int(phys * 0.55), 100 * 1024 * 1024))


def _choose_tile_rows(R, n, itemsize, vmem_limit):
    """Row tile: big enough to amortize the ~0.35us per-grid-step overhead,
    small enough for the VMEM budget (2 inputs x 2 buffers + f32 intermediates),
    and short enough to keep >= 4 parallel grid steps for v7x's two cores."""
    packing = max(1, 4 // itemsize)        # rows packed per sublane
    row_mult = 8 * packing                 # 8 f32 / 16 bf16 / 32 int8-fp8

    # Bytes of VMEM per tile row:
    #   2 inputs x 2 pipeline buffers (native dtype) + ~4 live f32 (TR, n)
    #   intermediates (x, t, e/sm, d).
    bytes_per_row = 4 * n * itemsize + 4 * n * 4
    budget = int(vmem_limit * 0.7)         # headroom for output bufs / spill
    tr = max(row_mult, budget // bytes_per_row)

    # Target ~4 MiB per input block (bytes-per-step target from the review).
    tr = min(tr, max(row_mult, (4 * 1024 * 1024) // max(1, n * itemsize)))
    tr = min(tr, 32768)

    # Keep >= 4 grid steps when the problem is big enough (megacore sharding).
    if R > 4 * row_mult:
        tr = min(tr, max(row_mult, R // 4))

    # Never exceed the (sublane-rounded) problem size; align for dense stores.
    tr = min(tr, _round_up(R, row_mult))
    align = 128 if tr >= 128 else row_mult
    tr = max(row_mult, (tr // align) * align)
    return tr


def classification_lp_distance(pred, true, p=2.0):
    assert pred.shape == true.shape
    n = pred.shape[-1]
    p = float(p)
    Z = (n - 1) * (1.0 / n) ** p + (1.0 - 1.0 / n) ** p
    inv_z = 1.0 / Z

    lead = pred.shape[:-1]
    R = int(math.prod(lead)) if lead else 1
    pred2 = pred.reshape(R, n)             # native dtype (halves HBM traffic for bf16)
    true2 = true.reshape(R, n)

    itemsize = max(pred2.dtype.itemsize, true2.dtype.itemsize)
    vmem_limit = _vmem_limit_bytes()
    TR = _choose_tile_rows(R, n, itemsize, vmem_limit)

    # No HBM-side padding: the ragged final tile is handled as a partial block.
    num_blocks = pl.cdiv(R, TR)

    out = pl.pallas_call(
        functools.partial(_lp_distance_kernel, p=p, inv_z=inv_z),
        out_shape=jax.ShapeDtypeStruct((num_blocks, TR), jnp.float32),
        grid_spec=pltpu.PrefetchScalarGridSpec(
            num_scalar_prefetch=0,
            grid=(num_blocks,),
            in_specs=[
                pl.BlockSpec((TR, n), lambda i: (i, 0)),
                pl.BlockSpec((TR, n), lambda i: (i, 0)),
            ],
            out_specs=pl.BlockSpec((1, TR), lambda i: (i, 0)),
        ),
        compiler_params=pltpu.CompilerParams(
            dimension_semantics=("parallel",),
            vmem_limit_bytes=vmem_limit,
        ),
    )(pred2, true2)

    # TODO(synk): for vocab-scale n, add a second ("arbitrary") grid axis over
    # n with an online softmax so the per-block VMEM footprint stays bounded.
    # TODO(synk): for small n (<128) on v7x / bf16-v6e, repack 4 rows per vreg
    # (segmented masked reductions) once the kernel flips from HBM- to VPU-bound.
    # TODO(synk): accept int32 labels for one-hot `true` to halve HBM traffic.

    # Loss is a reduction: return float32 regardless of input dtype.
    return out.reshape(num_blocks * TR)[:R].reshape(lead)


def _reference(pred, true, p=2.0):
    n = true.shape[-1]
    Z = (n - 1) * (1.0 / n) ** p + (1.0 - 1.0 / n) ** p
    sm = jax.nn.softmax(pred.astype(jnp.float32), axis=-1)
    return jnp.sum(jnp.abs(sm - true.astype(jnp.float32)) ** p, axis=-1) / Z


if __name__ == "__main__":
    key = jax.random.PRNGKey(0)
    k1, k2, k3, k4 = jax.random.split(key, 4)

    # Small case consistent with the module's classification use.
    B, S, N = 2, 8, 32
    pred = jax.random.normal(k1, (B, S, N), dtype=jnp.float32)
    labels = jax.random.randint(k2, (B, S), 0, N)
    true = jax.nn.one_hot(labels, N, dtype=jnp.float32)

    out = jax.block_until_ready(classification_lp_distance(pred, true, p=2.0))
    ref = _reference(pred, true, p=2.0)
    assert out.shape == (B, S)
    assert jnp.allclose(out, ref, atol=2e-3, rtol=2e-3)

    # Integer p > 2 exercises the square-and-multiply VPU path.
    out_p4 = jax.block_until_ready(classification_lp_distance(pred, true, p=4.0))
    ref_p4 = _reference(pred, true, p=4.0)
    assert jnp.allclose(out_p4, ref_p4, atol=2e-3, rtol=2e-3)

    # Larger case: multiple row tiles, a ragged (partial) final tile, and the
    # lane-dense (1, TR) output path (R = 2800, TR = 640 -> 5 grid steps).
    B2, S2, N2 = 40, 70, 32
    pred_b = jax.random.normal(k3, (B2, S2, N2), dtype=jnp.float32)
    labels_b = jax.random.randint(k4, (B2, S2), 0, N2)
    true_b = jax.nn.one_hot(labels_b, N2, dtype=jnp.float32)

    out_b = jax.block_until_ready(classification_lp_distance(pred_b, true_b, p=2.0))
    ref_b = _reference(pred_b, true_b, p=2.0)
    assert out_b.shape == (B2, S2)
    assert jnp.allclose(out_b, ref_b, atol=2e-3, rtol=2e-3)

    # bf16 inputs exercise the packed-sublane (multiple-of-16) row alignment
    # and the native-dtype DMA path; the loss still comes back as float32.
    pred_h = pred_b.astype(jnp.bfloat16)
    true_h = true_b.astype(jnp.bfloat16)
    out_h = jax.block_until_ready(classification_lp_distance(pred_h, true_h, p=2.0))
    ref_h = _reference(pred_h, true_h, p=2.0)
    assert out_h.dtype == jnp.float32
    assert jnp.allclose(out_h, ref_h, atol=5e-3, rtol=5e-3)

    print("KERNEL_OK")
</pallas_src>

<mosaic_0001>
module attributes {stable_mosaic.version = 11 : i64} {
  func.func @_lp_distance_kernel(%arg0: i32, %arg1: memref<16x32xf32, #tpu.memory_space<vmem>>, %arg2: memref<16x32xf32, #tpu.memory_space<vmem>>, %arg3: memref<1x16xf32, #tpu.memory_space<vmem>>) attributes {dimension_semantics = [#tpu.dimension_semantics<parallel>], iteration_bounds = array<i64: 1>, scalar_prefetch = 0 : i64, scratch_operands = 0 : i64, tpu.core_type = #tpu.core_type<tc>, window_params = [{transform_indices = @transform_0, window_bounds = array<i64: 16, 32>}, {transform_indices = @transform_1, window_bounds = array<i64: 16, 32>}, {transform_indices = @transform_2, window_bounds = array<i64: 1, 16>}]} {
    %c0 = arith.constant 0 : index
    %c0_0 = arith.constant 0 : index
    %0 = vector.load %arg1[%c0, %c0_0] : memref<16x32xf32, #tpu.memory_space<vmem>>, vector<16x32xf32>
    %c0_1 = arith.constant 0 : index
    %c0_2 = arith.constant 0 : index
    %1 = vector.load %arg2[%c0_1, %c0_2] : memref<16x32xf32, #tpu.memory_space<vmem>>, vector<16x32xf32>
    %cst = arith.constant 1.000000e+00 : f32
    %2 = vector.broadcast %cst : f32 to vector<32x1xf32>
    %cst_3 = arith.constant dense<0xFF800000> : vector<16xf32>
    %3 = vector.multi_reduction <maximumf>, %0, %cst_3 [1] : vector<16x32xf32> to vector<16xf32>
    %4 = vector.shape_cast %3 : vector<16xf32> to vector<16x1xf32>
    %5 = vector.broadcast %4 : vector<16x1xf32> to vector<16x32xf32>
    %6 = arith.subf %0, %5 : vector<16x32xf32>
    %7 = math.exp %6 : vector<16x32xf32>
    %cst_4 = arith.constant dense<0.000000e+00> : vector<16x1xf32>
    %8 = tpu.matmul %7, %2, %cst_4 {dimension_numbers = #tpu.dot_dimension_numbers<[1], [0], [0], [1], [0, 0, 1, 1], [], []>} : vector<16x32xf32>, vector<32x1xf32>, vector<16x1xf32> -> vector<16x1xf32>
    %9 = tpu.reciprocal %8 {approx = true} : vector<16x1xf32> -> vector<16x1xf32>
    %10 = arith.mulf %8, %9 : vector<16x1xf32>
    %cst_5 = arith.constant 2.000000e+00 : f32
    %11 = vector.broadcast %cst_5 : f32 to vector<16x1xf32>
    %12 = arith.subf %11, %10 : vector<16x1xf32>
    %13 = arith.mulf %9, %12 : vector<16x1xf32>
    %14 = vector.broadcast %13 : vector<16x1xf32> to vector<16x32xf32>
    %15 = arith.mulf %7, %14 : vector<16x32xf32>
    %16 = arith.subf %15, %1 : vector<16x32xf32>
    %17 = arith.mulf %16, %16 : vector<16x32xf32>
    %cst_6 = arith.constant dense<0.000000e+00> : vector<16x1xf32>
    %18 = tpu.matmul %17, %2, %cst_6 {dimension_numbers = #tpu.dot_dimension_numbers<[1], [0], [0], [1], [0, 0, 1, 1], [], []>} : vector<16x32xf32>, vector<32x1xf32>, vector<16x1xf32> -> vector<16x1xf32>
    %cst_7 = arith.constant 1.03225803 : f32
    %19 = vector.broadcast %cst_7 : f32 to vector<16x1xf32>
    %20 = arith.mulf %18, %19 : vector<16x1xf32>
    %21 = vector.shape_cast %20 : vector<16x1xf32> to vector<16xf32>
    %22 = vector.shape_cast %21 : vector<16xf32> to vector<1x16xf32>
    %c0_8 = arith.constant 0 : index
    %c0_9 = arith.constant 0 : index
    %23 = vector.load %arg3[%c0_8, %c0_9] : memref<1x16xf32, #tpu.memory_space<vmem>>, vector<1x16xf32>
    tpu.vector_store %arg3[%c0_8, %c0_9], %22 {strides = array<i32>} : memref<1x16xf32, #tpu.memory_space<vmem>>, vector<1x16xf32>,
    return
  }
  func.func @transform_0(%arg0: i32) -> (i32, i32) {
    %c0_i32 = arith.constant 0 : i32
    %c0_i32_0 = arith.constant 0 : i32
    return %arg0, %c0_i32 : i32, i32
  }
  func.func @transform_1(%arg0: i32) -> (i32, i32) {
    %c0_i32 = arith.constant 0 : i32
    %c0_i32_0 = arith.constant 0 : i32
    return %arg0, %c0_i32 : i32, i32
  }
  func.func @transform_2(%arg0: i32) -> (i32, i32) {
    %c0_i32 = arith.constant 0 : i32
    %c0_i32_0 = arith.constant 0 : i32
    return %arg0, %c0_i32 : i32, i32
  }
}

</mosaic_0001>

<llo_original>
// kernel: tpu_custom_call.1
$region0: #{tpu_custom_call.1}
  #allocation0 [shape = 'u32[]', space=smem, size = 0x4, offset = 0x4, fixed_abs, tag = 'smem constant byte address 0x4 - core index']
  #allocation1 [shape = 'u32[144,128]{1,0:T(1,128)}', space=vmem, size = 0x12000, scoped, tag = 'internal scratch']
  %s0 = inlined_call_operand.hbm [shape: f32[16,32], index: 0, kind: input, shape index: {}]
  %s1 = inlined_call_operand.hbm [shape: f32[16,32], index: 1, kind: input, shape index: {}]
  %s2 = inlined_call_operand.hbm [shape: f32[1,16], index: 2, kind: output, shape index: {}]
  %s3 = sld [smem:[#allocation0]]
  $region26: #{tpu_custom_call.1} parent=0
    _
  %s5 = ssub.s32 1, %s3
  %s6 = scalar_select 0, %s5, %s3
  $region1: #{tpu_custom_call.1} parent=0
    #allocation2 [shape = 'u8[8192]{0}', space=vmem, size = 0x2000, scoped, tag = 'input window, operand 0, single buffered']
    #allocation3 [shape = 's32[1]{0}', space=sflag, size = 0x4, scoped, tag = 'scoped memory for tpu_custom_call.1']
    #allocation4 [shape = 's32[1]{0}', space=sflag, size = 0x4, scoped, tag = 'scoped memory for tpu_custom_call.1']
    #allocation5 [shape = 'u8[8192]{0}', space=vmem, size = 0x2000, scoped, tag = 'input window, operand 1, single buffered']
    #allocation6 [shape = 's32[1]{0}', space=sflag, size = 0x4, scoped, tag = 'scoped memory for tpu_custom_call.1']
    #allocation7 [shape = 'u8[512]{0}', space=vmem, size = 0x400, scoped, tag = 'output window, operand 0, single buffered']
    %7 = vsyncpa [#allocation3], 0
    %8 = vsyncpa [#allocation6], 0
    %9 = vsyncpa [#allocation4], 0
    // Predicated region
    $region2: #{tpu_custom_call.1} parent=1 // pred_check
      _
    $region3: #{tpu_custom_call.1} parent=1 // pred_check_branch
      %11 = sbr.rel (0) target = $region5
    $region4: #{tpu_custom_call.1} parent=1 // pred_region
      %s13 = ssub.s32 256, 256
      %14 = vsyncadd [#allocation3], %s13
      %s15 = sshll.u32 [#allocation2], 4
      %s16 = int_to_ptr.vmem [resolvable:$true] %s15
      %21 = dma.hbm_to_vmem [thread:$0]  %s0, 256, %s16, [#allocation3], 128, 128, 8
    $region5: #{tpu_custom_call.1} parent=1 // pred_fallthru
      _
    // Predicated region
    $region6: #{tpu_custom_call.1} parent=1 // pred_check
      _
    $region7: #{tpu_custom_call.1} parent=1 // pred_check_branch
      %23 = sbr.rel (0) target = $region9
    $region8: #{tpu_custom_call.1} parent=1 // pred_region
      %s25 = ssub.s32 256, 256
      %26 = vsyncadd [#allocation6], %s25
      %s27 = sshll.u32 [#allocation5], 4
      %s28 = int_to_ptr.vmem [resolvable:$true] %s27
      %33 = dma.hbm_to_vmem [thread:$0]  %s1, 256, %s28, [#allocation6], 128, 128, 8
    $region9: #{tpu_custom_call.1} parent=1 // pred_fallthru
      _
    // Predicated region
    $region10: #{tpu_custom_call.1} parent=1 // pred_check
      _
    $region11: #{tpu_custom_call.1} parent=1 // pred_check_branch
      %35 = sbr.rel (0) target = $region13
    $region12: #{tpu_custom_call.1} parent=1 // pred_region
      %36 = dma.done [#allocation3], 256
    $region13: #{tpu_custom_call.1} parent=1 // pred_fallthru
      _
    // Predicated region
    $region14: #{tpu_custom_call.1} parent=1 // pred_check
      _
    $region15: #{tpu_custom_call.1} parent=1 // pred_check_branch
      %38 = sbr.rel (0) target = $region17
    $region16: #{tpu_custom_call.1} parent=1 // pred_region
      %39 = dma.done [#allocation6], 256
    $region17: #{tpu_custom_call.1} parent=1 // pred_fallthru
      _
    %v40 = vld [vmem:[#allocation2] sm:$0xff]
    %v41 = vld [vmem:[#allocation2 + $0x8] sm:$0xff]
    %v42 = vld [vmem:[#allocation5] sm:$0xff]
    %v43 = vld [vmem:[#allocation5 + $0x8] sm:$0xff]
    %vm44 = vcmask 261120
    %v45 = vsel %vm44, %v40, -inf
    %46 = vmax.xlane.f32.xlu0 %v45
    %v47 = vpop.xlane.xlu0 %46
    %v48 = vsel %vm44, %v41, -inf
    %49 = vmax.xlane.f32.xlu0 %v48
    %v50 = vpop.xlane.xlu0 %49
    %v51 = vsub.f32 %v40, %v47
    %v52 = vsub.f32 %v41, %v50
    %v53 = vmul.f32 %v51, 1.442695
    %v54 = vpow.pop %v53
    %v55 = vmul.f32 %v52, 1.442695
    %v56 = vpow.pop %v55
    %v58 = vsel %vm44, %v54, 0
    %v61 = vsel %vm44, %v56, 0
    %63 = vmatprep.subr.mxu0 0.0
    %64 = vmatpush1.msra.mxu0 1.0
    %65 = vmatprep.subr.mxu0 0.0
    %66 = vmatpush1.msra.mxu0 1.0
    %67 = vmatprep.subr.mxu0 0.0
    %68 = vmatpush1.msra.mxu0 1.0
    %69 = vmatprep.subr.mxu0 0.0
    %70 = vmatpush1.msra.mxu0 1.0
    %71 = vmatprep.subr.mxu0 0.0
    %72 = vmatpush1.msra.mxu0 0.0
    %73 = vmatprep.subr.mxu0 0.0
    %74 = vmatpush1.msra.mxu0 0.0
    %75 = vmatprep.subr.mxu0 0.0
    %76 = vmatpush1.msra.mxu0 0.0
    %77 = vmatprep.subr.mxu0 0.0
    %78 = vmatpush1.msra.mxu0 0.0
    %79 = vmatprep.subr.mxu0 0.0
    %80 = vmatpush1.msra.mxu0 0.0
    %81 = vmatprep.subr.mxu0 0.0
    %82 = vmatpush1.msra.mxu0 0.0
    %83 = vmatprep.subr.mxu0 0.0
    %84 = vmatpush1.msra.mxu0 0.0
    %85 = vmatprep.subr.mxu0 0.0
    %86 = vmatpush1.msra.mxu0 0.0
    %87 = vmatprep.subr.mxu0 0.0
    %88 = vmatpush1.msra.mxu0 0.0
    %89 = vmatprep.subr.mxu0 0.0
    %90 = vmatpush1.msra.mxu0 0.0
    %91 = vmatprep.subr.mxu0 0.0
    %92 = vmatpush1.msra.mxu0 0.0
    %93 = vmatprep.subr.mxu0 0.0
    %94 = vmatpush1.msra.mxu0 0.0
    %95 = vmatprep.subr.mxu0 0.0
    %96 = vmatpush1.msra.mxu0 0.0
    %97 = vmatprep.subr.mxu0 0.0
    %98 = vmatpush1.msra.mxu0 0.0
    %99 = vmatprep.subr.mxu0 0.0
    %100 = vmatpush1.msra.mxu0 0.0
    %101 = vmatprep.subr.mxu0 0.0
    %102 = vmatpush1.msra.mxu0 0.0
    %103 = vmatprep.subr.mxu0 0.0
    %104 = vmatpush1.msra.mxu0 0.0
    %105 = vmatprep.subr.mxu0 0.0
    %106 = vmatpush1.msra.mxu0 0.0
    %107 = vmatprep.subr.mxu0 0.0
    %108 = vmatpush1.msra.mxu0 0.0
    %109 = vmatprep.subr.mxu0 0.0
    %110 = vmatpush1.msra.mxu0 0.0
    %111 = vmatprep.subr.mxu0 0.0
    %112 = vmatpush1.msra.mxu0 0.0
    %113 = vmatprep.subr.mxu0 0.0
    %114 = vmatpush1.msra.mxu0 0.0
    %115 = vmatprep.subr.mxu0 0.0
    %116 = vmatpush1.msra.mxu0 0.0
    %117 = vmatprep.subr.mxu0 0.0
    %118 = vmatpush1.msra.mxu0 0.0
    %119 = vmatprep.subr.mxu0 0.0
    %120 = vmatpush1.msra.mxu0 0.0
    %121 = vmatprep.subr.mxu0 0.0
    %122 = vmatpush1.msra.mxu0 0.0
    %123 = vmatprep.subr.mxu0 0.0
    %124 = vmatpush1.msra.mxu0 0.0
    %125 = vmatprep.subr.mxu0 0.0
    %126 = vmatpush1.msra.mxu0 0.0
    %127 = vmatprep.mubr.f32.mxu0 0.0
    %128 = vmatmul.mubr.f32.gmra.mrb[0].mxu0 %v58
    %v129 = vpop.f32.mrb[0].mxu0
    %v130 = vadd.f32 0.0, %v129
    %v131 = vpop.f32.mrb[0].mxu0
    %132 = vmatprep.mubr.f32.mxu0 0.0
    %133 = vmatmul.mubr.f32.gmra.mrb[0].mxu0 %v61
    %v134 = vpop.f32.mrb[0].mxu0
    %v135 = vadd.f32 0.0, %v134
    %v136 = vpop.f32.mrb[0].mxu0
    %137 = vdwg.mxu0
    %v138 = vrcp.pop %v130
    %v139 = vrcp.pop %v135
    %v140 = vmul.f32 %v130, %v138
    %v141 = vmul.f32 %v135, %v139
    %v142 = vsub.f32 2.0, %v140
    %v143 = vsub.f32 2.0, %v141
    %v144 = vmul.f32 %v138, %v142
    %v145 = vmul.f32 %v139, %v143
    %147 = vset.pattern.permute.xlu0 0
    %148 = vperm.xlu0 %147, %v144
    %v149 = vpop.permute.xlu0 %148
    %152 = vset.pattern.permute.xlu0 0
    %153 = vperm.xlu0 %152, %v145
    %v154 = vpop.permute.xlu0 %153
    %v156 = vmul.f32 %v54, %v149
    %v157 = vmul.f32 %v56, %v154
    %v158 = vsub.f32 %v156, %v42
    %v159 = vsub.f32 %v157, %v43
    %v160 = vmul.f32 %v158, %v158
    %v161 = vmul.f32 %v159, %v159
    %v163 = vsel %vm44, %v160, 0
    %v166 = vsel %vm44, %v161, 0
    %168 = vmatprep.subr.mxu0 0.0
    %169 = vmatpush1.msra.mxu0 1.0
    %170 = vmatprep.subr.mxu0 0.0
    %171 = vmatpush1.msra.mxu0 1.0
    %172 = vmatprep.subr.mxu0 0.0
    %173 = vmatpush1.msra.mxu0 1.0
    %174 = vmatprep.subr.mxu0 0.0
    %175 = vmatpush1.msra.mxu0 1.0
    %176 = vmatprep.subr.mxu0 0.0
    %177 = vmatpush1.msra.mxu0 0.0
    %178 = vmatprep.subr.mxu0 0.0
    %179 = vmatpush1.msra.mxu0 0.0
    %180 = vmatprep.subr.mxu0 0.0
    %181 = vmatpush1.msra.mxu0 0.0
    %182 = vmatprep.subr.mxu0 0.0
    %183 = vmatpush1.msra.mxu0 0.0
    %184 = vmatprep.subr.mxu0 0.0
    %185 = vmatpush1.msra.mxu0 0.0
    %186 = vmatprep.subr.mxu0 0.0
    %187 = vmatpush1.msra.mxu0 0.0
    %188 = vmatprep.subr.mxu0 0.0
    %189 = vmatpush1.msra.mxu0 0.0
    %190 = vmatprep.subr.mxu0 0.0
    %191 = vmatpush1.msra.mxu0 0.0
    %192 = vmatprep.subr.mxu0 0.0
    %193 = vmatpush1.msra.mxu0 0.0
    %194 = vmatprep.subr.mxu0 0.0
    %195 = vmatpush1.msra.mxu0 0.0
    %196 = vmatprep.subr.mxu0 0.0
    %197 = vmatpush1.msra.mxu0 0.0
    %198 = vmatprep.subr.mxu0 0.0
    %199 = vmatpush1.msra.mxu0 0.0
    %200 = vmatprep.subr.mxu0 0.0
    %201 = vmatpush1.msra.mxu0 0.0
    %202 = vmatprep.subr.mxu0 0.0
    %203 = vmatpush1.msra.mxu0 0.0
    %204 = vmatprep.subr.mxu0 0.0
    %205 = vmatpush1.msra.mxu0 0.0
    %206 = vmatprep.subr.mxu0 0.0
    %207 = vmatpush1.msra.mxu0 0.0
    %208 = vmatprep.subr.mxu0 0.0
    %209 = vmatpush1.msra.mxu0 0.0
    %210 = vmatprep.subr.mxu0 0.0
    %211 = vmatpush1.msra.mxu0 0.0
    %212 = vmatprep.subr.mxu0 0.0
    %213 = vmatpush1.msra.mxu0 0.0
    %214 = vmatprep.subr.mxu0 0.0
    %215 = vmatpush1.msra.mxu0 0.0
    %216 = vmatprep.subr.mxu0 0.0
    %217 = vmatpush1.msra.mxu0 0.0
    %218 = vmatprep.subr.mxu0 0.0
    %219 = vmatpush1.msra.mxu0 0.0
    %220 = vmatprep.subr.mxu0 0.0
    %221 = vmatpush1.msra.mxu0 0.0
    %222 = vmatprep.subr.mxu0 0.0
    %223 = vmatpush1.msra.mxu0 0.0
    %224 = vmatprep.subr.mxu0 0.0
    %225 = vmatpush1.msra.mxu0 0.0
    %226 = vmatprep.subr.mxu0 0.0
    %227 = vmatpush1.msra.mxu0 0.0
    %228 = vmatprep.subr.mxu0 0.0
    %229 = vmatpush1.msra.mxu0 0.0
    %230 = vmatprep.subr.mxu0 0.0
    %231 = vmatpush1.msra.mxu0 0.0
    %232 = vmatprep.mubr.f32.mxu0 0.0
    %233 = vmatmul.mubr.f32.gmra.mrb[0].mxu0 %v163
    %v234 = vpop.f32.mrb[0].mxu0
    %v235 = vadd.f32 0.0, %v234
    %v236 = vpop.f32.mrb[0].mxu0
    %237 = vmatprep.mubr.f32.mxu0 0.0
    %238 = vmatmul.mubr.f32.gmra.mrb[0].mxu0 %v166
    %v239 = vpop.f32.mrb[0].mxu0
    %v240 = vadd.f32 0.0, %v239
    %v241 = vpop.f32.mrb[0].mxu0
    %242 = vdwg.mxu0
    %v243 = vmul.f32 %v235, 1.032258
    %v244 = vmul.f32 %v240, 1.032258
    %247 = vset.pattern.permute.xlu0 0
    %248 = vperm.xlu0 %247, %v243
    %v249 = vpop.permute.xlu0 %248
    %250 = vset.pattern.permute.xlu0 0
    %251 = vperm.xlu0 %250, %v244
    %v252 = vpop.permute.xlu0 %251
    %v253 = vlaneseq
    %v254 = vand.u32 %v253, 127
    %v255 = vlaneseq
    %v256 = vshrl.u32 %v255, 7
    %v257 = vsub.s32 %v254, %v256
    %v258 = vrot.slane %v249, %v257
    %v259 = vadd.s32 %v254, 4294967288
    %v260 = vlaneseq
    %v261 = vshrl.u32 %v260, 7
    %v262 = vsub.s32 %v259, %v261
    %v263 = vrot.slane %v252, %v262
    %vm264 = vcmask 130112
    %v265 = vsel %vm264, %v263, %v258
    %vm267 = vcmask 122880
    %268 = vst.msk [vmem:[#allocation7] sm:$0x1] %vm267, %v265
    // Predicated region
    $region18: #{tpu_custom_call.1} parent=1 // pred_check
      _
    $region19: #{tpu_custom_call.1} parent=1 // pred_check_branch
      %270 = sbr.rel (0) target = $region21
    $region20: #{tpu_custom_call.1} parent=1 // pred_region
      %s272 = ssub.s32 16, 16
      %273 = vsyncadd [#allocation4], %s272
      %s275 = sshll.u32 [#allocation7], 4
      %s276 = int_to_ptr.vmem [resolvable:$true] %s275
      %278 = dma.vmem_to_hbm [thread:$0]  %s276, 16, %s2, [#allocation4]
    $region21: #{tpu_custom_call.1} parent=1 // pred_fallthru
      _
    // Predicated region
    $region22: #{tpu_custom_call.1} parent=1 // pred_check
      _
    $region23: #{tpu_custom_call.1} parent=1 // pred_check_branch
      %280 = sbr.rel (0) target = $region25
    $region24: #{tpu_custom_call.1} parent=1 // pred_region
      %281 = dma.done [#allocation4], 16
    $region25: #{tpu_custom_call.1} parent=1 // pred_fallthru
      _
    %282 = vsyncpa [#allocation3], 1
    %283 = vsyncpa [#allocation6], 1
    %284 = vsyncpa [#allocation4], 1

</llo_original>
